<compile_context>
chip_gen: v7x
topology: tpu7x:2x2x1
jax: 0.10.0
libtpu: 0.0.40
codegen_flags: <defaults>
</compile_context>

<pallas_src>
import jax
import jax.numpy as jnp
from jax.experimental import pallas as pl
from jax.experimental.pallas import tpu as pltpu


def graph_embedding_kernel(
    x_ref,      # [TB, H*E]  flattened multi-hot features
    w1_ref,     # [H*E, H*D] kron(I_H, W1)
    b1_ref,     # [1, H*D]   tile(b1, H)
    wc_ref,     # [H*D, D]   kron(wc, I_D)
    bc_ref,     # [1, 1]
    wde_ref,    # [D, H*D]   kron(wd^T, I_D)
    bde_ref,    # [1, H*D]   repeat(bd, D)
    wcd_ref,    # [D, H*E]   kron(wd^T, W2)  (fused decoder weights)
    bcd_ref,    # [1, H*E]   kron(bd^T, colsum(W2)) + tile(b2, H)
    dec_ref,    # out: [TB, H*E]  x_decoder (flattened)
    emb_ref,    # out: [TB, H*D]  x_embedding (flattened)
    deemb_ref,  # out: [TB, H*D]  x_de_embedding (flattened)
    comb_ref,   # out: [TB, D]    x_combine.permute(0, 2, 1) (flattened)
):
    x = x_ref[...]

    # ---- w_node_embedding: per-hot-slot Linear(E -> D) as one block-diag matmul ----
    emb = jnp.dot(x, w1_ref[...], preferred_element_type=jnp.float32) + b1_ref[...]
    emb_ref[...] = emb.astype(emb_ref.dtype)

    # ---- embedding_combine_coef: weighted sum over the H hot slots ----
    comb = jnp.dot(emb, wc_ref[...], preferred_element_type=jnp.float32) + bc_ref[...]
    comb_ref[...] = comb.astype(comb_ref.dtype)

    # ---- decoder_divide_coef: Linear(1 -> H) expansion (already "permuted back") ----
    de = jnp.dot(comb, wde_ref[...], preferred_element_type=jnp.float32) + bde_ref[...]
    deemb_ref[...] = de.astype(deemb_ref.dtype)

    # ---- w_node_decoder, fused with the divide step: dec = comb @ kron(wd^T, W2) + bias ----
    dec = jnp.dot(comb, wcd_ref[...], preferred_element_type=jnp.float32) + bcd_ref[...]
    dec_ref[...] = dec.astype(dec_ref.dtype)


def graph_embedding_forward(x, params, *, tb_target=1024):
    """x: [B, H, E] float32.

    Returns (x_decoder [B,H,E], x_embedding [B,H,D],
             x_de_embedding [B,H,D], x_combine_perm [B,1,D])
    exactly matching the PyTorch module's forward.
    """
    assert tb_target % 8 == 0, "batch tile must be a multiple of 8 (sublanes)"
    B, H, E = x.shape
    D = params["w1"].shape[1]
    HE, HD = H * E, H * D

    # --- Build lane-dense (Kronecker / block-diagonal) weights once per call. ---
    f32 = jnp.float32
    eye_h = jnp.eye(H, dtype=f32)
    eye_d = jnp.eye(D, dtype=f32)
    w1_big = jnp.kron(eye_h, params["w1"])                        # [H*E, H*D]
    b1_flat = jnp.tile(params["b1"], (1, H))                      # [1, H*D]
    wc_big = jnp.kron(params["wc"], eye_d)                        # [H*D, D]
    bc = params["bc"]                                             # [1, 1]
    wde_big = jnp.kron(params["wd"].reshape(1, H), eye_d)         # [D, H*D]
    bde_flat = jnp.repeat(params["bd"][:, 0], D)[None, :]         # [1, H*D]
    # Fused decoder path: dec = comb @ kron(wd^T, W2) + (kron(bd^T, colsum(W2)) + tile(b2)).
    wcd_big = jnp.kron(params["wd"].reshape(1, H), params["w2"])  # [D, H*E]
    w2_colsum = jnp.sum(params["w2"], axis=0, keepdims=True)      # [1, E]
    bcd_flat = (jnp.kron(params["bd"].reshape(1, H), w2_colsum)
                + jnp.tile(params["b2"], (1, H)))                 # [1, H*E]

    # --- Batch tiling: pick TB, pad B up to a multiple of TB (tail handling). ---
    b_pad8 = ((B + 7) // 8) * 8
    TB = b_pad8 if b_pad8 <= tb_target else tb_target
    Bp = ((B + TB - 1) // TB) * TB
    if Bp != B:
        x = jnp.pad(x, ((0, Bp - B), (0, 0), (0, 0)))
    x_flat = x.reshape(Bp, HE)                                    # lane-dense input
    grid = (pl.cdiv(Bp, TB),)

    out_shapes = (
        jax.ShapeDtypeStruct((Bp, HE), jnp.float32),  # x_decoder (flat)
        jax.ShapeDtypeStruct((Bp, HD), jnp.float32),  # x_embedding (flat)
        jax.ShapeDtypeStruct((Bp, HD), jnp.float32),  # x_de_embedding (flat)
        jax.ShapeDtypeStruct((Bp, D), jnp.float32),   # x_combine_perm (flat)
    )

    grid_spec = pltpu.PrefetchScalarGridSpec(
        num_scalar_prefetch=0,
        grid=grid,
        in_specs=[
            pl.BlockSpec((TB, HE), lambda i: (i, 0)),   # x tile
            pl.BlockSpec((HE, HD), lambda i: (0, 0)),   # w1_big   (resident)
            pl.BlockSpec((1, HD), lambda i: (0, 0)),    # b1_flat
            pl.BlockSpec((HD, D), lambda i: (0, 0)),    # wc_big
            pl.BlockSpec((1, 1), lambda i: (0, 0)),     # bc
            pl.BlockSpec((D, HD), lambda i: (0, 0)),    # wde_big
            pl.BlockSpec((1, HD), lambda i: (0, 0)),    # bde_flat
            pl.BlockSpec((D, HE), lambda i: (0, 0)),    # wcd_big
            pl.BlockSpec((1, HE), lambda i: (0, 0)),    # bcd_flat
        ],
        out_specs=[
            pl.BlockSpec((TB, HE), lambda i: (i, 0)),
            pl.BlockSpec((TB, HD), lambda i: (i, 0)),
            pl.BlockSpec((TB, HD), lambda i: (i, 0)),
            pl.BlockSpec((TB, D), lambda i: (i, 0)),
        ],
    )

    dec_f, emb_f, de_f, comb_f = pl.pallas_call(
        graph_embedding_kernel,
        out_shape=out_shapes,
        grid_spec=grid_spec,
        compiler_params=pltpu.CompilerParams(
            dimension_semantics=("parallel",),
            vmem_limit_bytes=64 * 1024 * 1024,
        ),
    )(x_flat, w1_big, b1_flat, wc_big, bc, wde_big, bde_flat, wcd_big, bcd_flat)

    # Restore the module's output shapes (row-major reshapes, metadata-only).
    x_decoder = dec_f[:B].reshape(B, H, E)
    x_embedding = emb_f[:B].reshape(B, H, D)
    x_de_embedding = de_f[:B].reshape(B, H, D)
    x_combine_perm = comb_f[:B].reshape(B, 1, D)
    return x_decoder, x_embedding, x_de_embedding, x_combine_perm


def init_params(key, embedding_num, embedding_dim, hot_num):
    """Deterministic PyTorch-Linear-style init (uniform +/- 1/sqrt(fan_in))."""
    ks = jax.random.split(key, 8)

    def u(k, shape, fan_in):
        bound = 1.0 / jnp.sqrt(jnp.float32(fan_in))
        return jax.random.uniform(k, shape, jnp.float32, -bound, bound)

    E, D, H = embedding_num, embedding_dim, hot_num
    return {
        # w_node_embedding: Linear(E, D) -> weight [D, E]; stored transposed [E, D]
        "w1": u(ks[0], (E, D), E),
        "b1": u(ks[1], (1, D), E),
        # embedding_combine_coef: Linear(H, 1) -> weight [1, H]; stored as column [H, 1]
        "wc": u(ks[2], (H, 1), H),
        "bc": u(ks[3], (1, 1), H),
        # decoder_divide_coef: Linear(1, H) -> weight [H, 1]; stored as column [H, 1]
        "wd": u(ks[4], (H, 1), 1),
        "bd": u(ks[5], (H, 1), 1),
        # w_node_decoder: Linear(D, E) -> weight [E, D]; stored transposed [D, E]
        "w2": u(ks[6], (D, E), D),
        "b2": u(ks[7], (1, E), D),
    }


def reference_forward(x, p):
    """Pure-JAX reference mirroring the PyTorch forward."""
    x_emb = jnp.einsum("bhe,ed->bhd", x, p["w1"]) + p["b1"][None]             # [B,H,D]
    x_comb = jnp.einsum("bhd,h->bd", x_emb, p["wc"][:, 0]) + p["bc"][0, 0]    # [B,D]
    x_comb_perm = x_comb[:, None, :]                                          # [B,1,D]
    x_de = x_comb[:, None, :] * p["wd"][None, :, 0:1] + p["bd"][None, :, 0:1]  # [B,H,D]
    x_dec = jnp.einsum("bhd,de->bhe", x_de, p["w2"]) + p["b2"][None]          # [B,H,E]
    return x_dec, x_emb, x_de, x_comb_perm


def _check(outs, refs):
    for o, r in zip(outs, refs):
        assert o.shape == r.shape, (o.shape, r.shape)
        assert jnp.allclose(o, r, atol=1e-4, rtol=1e-4), "mismatch vs reference"


if __name__ == "__main__":
    # Small shapes consistent with the module's forward.
    B, hot_num, embedding_num, embedding_dim = 2, 8, 32, 16

    key = jax.random.PRNGKey(0)
    k_in, k_par, k_in2 = jax.random.split(key, 3)

    params = init_params(k_par, embedding_num, embedding_dim, hot_num)

    # multi_hot_feature: [B, hot_num, embedding_num]
    x = (jax.random.uniform(k_in, (B, hot_num, embedding_num)) < 0.25).astype(jnp.float32)
    outs = jax.block_until_ready(graph_embedding_forward(x, params))
    _check(outs, reference_forward(x, params))

    # Also exercise multi-tile grid + tail padding (grid of 2, partial last tile).
    B2 = 100
    x2 = (jax.random.uniform(k_in2, (B2, hot_num, embedding_num)) < 0.25).astype(jnp.float32)
    outs2 = jax.block_until_ready(graph_embedding_forward(x2, params, tb_target=64))
    _check(outs2, reference_forward(x2, params))

    print("KERNEL_OK")
</pallas_src>

<mosaic_0001>
module attributes {stable_mosaic.version = 11 : i64} {
  func.func @graph_embedding_kernel(%arg0: i32, %arg1: memref<8x256xf32, #tpu.memory_space<vmem>>, %arg2: memref<256x128xf32, #tpu.memory_space<vmem>>, %arg3: memref<1x128xf32, #tpu.memory_space<vmem>>, %arg4: memref<128x16xf32, #tpu.memory_space<vmem>>, %arg5: memref<1x1xf32, #tpu.memory_space<vmem>>, %arg6: memref<16x128xf32, #tpu.memory_space<vmem>>, %arg7: memref<1x128xf32, #tpu.memory_space<vmem>>, %arg8: memref<16x256xf32, #tpu.memory_space<vmem>>, %arg9: memref<1x256xf32, #tpu.memory_space<vmem>>, %arg10: memref<8x256xf32, #tpu.memory_space<vmem>>, %arg11: memref<8x128xf32, #tpu.memory_space<vmem>>, %arg12: memref<8x128xf32, #tpu.memory_space<vmem>>, %arg13: memref<8x16xf32, #tpu.memory_space<vmem>>) attributes {dimension_semantics = [#tpu.dimension_semantics<parallel>], iteration_bounds = array<i64: 1>, scalar_prefetch = 0 : i64, scratch_operands = 0 : i64, tpu.core_type = #tpu.core_type<tc>, window_params = [{transform_indices = @transform_0, window_bounds = array<i64: 8, 256>}, {pipeline_mode = #tpu.pipeline_mode<synchronous>, transform_indices = @transform_1, window_bounds = array<i64: 256, 128>}, {pipeline_mode = #tpu.pipeline_mode<synchronous>, transform_indices = @transform_2, window_bounds = array<i64: 1, 128>}, {pipeline_mode = #tpu.pipeline_mode<synchronous>, transform_indices = @transform_3, window_bounds = array<i64: 128, 16>}, {pipeline_mode = #tpu.pipeline_mode<synchronous>, transform_indices = @transform_4, window_bounds = array<i64: 1, 1>}, {pipeline_mode = #tpu.pipeline_mode<synchronous>, transform_indices = @transform_5, window_bounds = array<i64: 16, 128>}, {pipeline_mode = #tpu.pipeline_mode<synchronous>, transform_indices = @transform_6, window_bounds = array<i64: 1, 128>}, {pipeline_mode = #tpu.pipeline_mode<synchronous>, transform_indices = @transform_7, window_bounds = array<i64: 16, 256>}, {pipeline_mode = #tpu.pipeline_mode<synchronous>, transform_indices = @transform_8, window_bounds = array<i64: 1, 256>}, {transform_indices = @transform_9, window_bounds = array<i64: 8, 256>}, {transform_indices = @transform_10, window_bounds = array<i64: 8, 128>}, {transform_indices = @transform_11, window_bounds = array<i64: 8, 128>}, {transform_indices = @transform_12, window_bounds = array<i64: 8, 16>}]} {
    %c0 = arith.constant 0 : index
    %c0_0 = arith.constant 0 : index
    %0 = vector.load %arg1[%c0, %c0_0] : memref<8x256xf32, #tpu.memory_space<vmem>>, vector<8x256xf32>
    %c0_1 = arith.constant 0 : index
    %c0_2 = arith.constant 0 : index
    %1 = vector.load %arg2[%c0_1, %c0_2] : memref<256x128xf32, #tpu.memory_space<vmem>>, vector<256x128xf32>
    %cst = arith.constant dense<0.000000e+00> : vector<8x128xf32>
    %2 = tpu.matmul %0, %1, %cst {dimension_numbers = #tpu.dot_dimension_numbers<[1], [0], [0], [1], [0, 0, 1, 1], [], []>} : vector<8x256xf32>, vector<256x128xf32>, vector<8x128xf32> -> vector<8x128xf32>
    %c0_3 = arith.constant 0 : index
    %c0_4 = arith.constant 0 : index
    %3 = vector.load %arg3[%c0_3, %c0_4] : memref<1x128xf32, #tpu.memory_space<vmem>>, vector<1x128xf32>
    %4 = vector.broadcast %3 : vector<1x128xf32> to vector<8x128xf32>
    %5 = arith.addf %2, %4 : vector<8x128xf32>
    %c0_5 = arith.constant 0 : index
    %c0_6 = arith.constant 0 : index
    %6 = vector.load %arg11[%c0_5, %c0_6] : memref<8x128xf32, #tpu.memory_space<vmem>>, vector<8x128xf32>
    tpu.vector_store %arg11[%c0_5, %c0_6], %5 {strides = array<i32>} : memref<8x128xf32, #tpu.memory_space<vmem>>, vector<8x128xf32>,
    %c0_7 = arith.constant 0 : index
    %c0_8 = arith.constant 0 : index
    %7 = vector.load %arg4[%c0_7, %c0_8] : memref<128x16xf32, #tpu.memory_space<vmem>>, vector<128x16xf32>
    %cst_9 = arith.constant dense<0.000000e+00> : vector<8x16xf32>
    %8 = tpu.matmul %5, %7, %cst_9 {dimension_numbers = #tpu.dot_dimension_numbers<[1], [0], [0], [1], [0, 0, 1, 1], [], []>} : vector<8x128xf32>, vector<128x16xf32>, vector<8x16xf32> -> vector<8x16xf32>
    %c0_10 = arith.constant 0 : index
    %c0_11 = arith.constant 0 : index
    %9 = vector.load %arg5[%c0_10, %c0_11] : memref<1x1xf32, #tpu.memory_space<vmem>>, vector<1x1xf32>
    %10 = vector.broadcast %9 : vector<1x1xf32> to vector<8x16xf32>
    %11 = arith.addf %8, %10 : vector<8x16xf32>
    %c0_12 = arith.constant 0 : index
    %c0_13 = arith.constant 0 : index
    %12 = vector.load %arg13[%c0_12, %c0_13] : memref<8x16xf32, #tpu.memory_space<vmem>>, vector<8x16xf32>
    tpu.vector_store %arg13[%c0_12, %c0_13], %11 {strides = array<i32>} : memref<8x16xf32, #tpu.memory_space<vmem>>, vector<8x16xf32>,
    %c0_14 = arith.constant 0 : index
    %c0_15 = arith.constant 0 : index
    %13 = vector.load %arg6[%c0_14, %c0_15] : memref<16x128xf32, #tpu.memory_space<vmem>>, vector<16x128xf32>
    %cst_16 = arith.constant dense<0.000000e+00> : vector<8x128xf32>
    %14 = tpu.matmul %11, %13, %cst_16 {dimension_numbers = #tpu.dot_dimension_numbers<[1], [0], [0], [1], [0, 0, 1, 1], [], []>} : vector<8x16xf32>, vector<16x128xf32>, vector<8x128xf32> -> vector<8x128xf32>
    %c0_17 = arith.constant 0 : index
    %c0_18 = arith.constant 0 : index
    %15 = vector.load %arg7[%c0_17, %c0_18] : memref<1x128xf32, #tpu.memory_space<vmem>>, vector<1x128xf32>
    %16 = vector.broadcast %15 : vector<1x128xf32> to vector<8x128xf32>
    %17 = arith.addf %14, %16 : vector<8x128xf32>
    %c0_19 = arith.constant 0 : index
    %c0_20 = arith.constant 0 : index
    %18 = vector.load %arg12[%c0_19, %c0_20] : memref<8x128xf32, #tpu.memory_space<vmem>>, vector<8x128xf32>
    tpu.vector_store %arg12[%c0_19, %c0_20], %17 {strides = array<i32>} : memref<8x128xf32, #tpu.memory_space<vmem>>, vector<8x128xf32>,
    %c0_21 = arith.constant 0 : index
    %c0_22 = arith.constant 0 : index
    %19 = vector.load %arg8[%c0_21, %c0_22] : memref<16x256xf32, #tpu.memory_space<vmem>>, vector<16x256xf32>
    %cst_23 = arith.constant dense<0.000000e+00> : vector<8x256xf32>
    %20 = tpu.matmul %11, %19, %cst_23 {dimension_numbers = #tpu.dot_dimension_numbers<[1], [0], [0], [1], [0, 0, 1, 1], [], []>} : vector<8x16xf32>, vector<16x256xf32>, vector<8x256xf32> -> vector<8x256xf32>
    %c0_24 = arith.constant 0 : index
    %c0_25 = arith.constant 0 : index
    %21 = vector.load %arg9[%c0_24, %c0_25] : memref<1x256xf32, #tpu.memory_space<vmem>>, vector<1x256xf32>
    %22 = vector.broadcast %21 : vector<1x256xf32> to vector<8x256xf32>
    %23 = arith.addf %20, %22 : vector<8x256xf32>
    %c0_26 = arith.constant 0 : index
    %c0_27 = arith.constant 0 : index
    %24 = vector.load %arg10[%c0_26, %c0_27] : memref<8x256xf32, #tpu.memory_space<vmem>>, vector<8x256xf32>
    tpu.vector_store %arg10[%c0_26, %c0_27], %23 {strides = array<i32>} : memref<8x256xf32, #tpu.memory_space<vmem>>, vector<8x256xf32>,
    return
  }
  func.func @transform_0(%arg0: i32) -> (i32, i32) {
    %c0_i32 = arith.constant 0 : i32
    %c0_i32_0 = arith.constant 0 : i32
    return %arg0, %c0_i32 : i32, i32
  }
  func.func @transform_1(%arg0: i32) -> (i32, i32) {
    %c0_i32 = arith.constant 0 : i32
    %c0_i32_0 = arith.constant 0 : i32
    %c0_i32_1 = arith.constant 0 : i32
    return %c0_i32, %c0_i32_0 : i32, i32
  }
  func.func @transform_2(%arg0: i32) -> (i32, i32) {
    %c0_i32 = arith.constant 0 : i32
    %c0_i32_0 = arith.constant 0 : i32
    %c0_i32_1 = arith.constant 0 : i32
    return %c0_i32, %c0_i32_0 : i32, i32
  }
  func.func @transform_3(%arg0: i32) -> (i32, i32) {
    %c0_i32 = arith.constant 0 : i32
    %c0_i32_0 = arith.constant 0 : i32
    %c0_i32_1 = arith.constant 0 : i32
    return %c0_i32, %c0_i32_0 : i32, i32
  }
  func.func @transform_4(%arg0: i32) -> (i32, i32) {
    %c0_i32 = arith.constant 0 : i32
    %c0_i32_0 = arith.constant 0 : i32
    %c0_i32_1 = arith.constant 0 : i32
    return %c0_i32, %c0_i32_0 : i32, i32
  }
  func.func @transform_5(%arg0: i32) -> (i32, i32) {
    %c0_i32 = arith.constant 0 : i32
    %c0_i32_0 = arith.constant 0 : i32
    %c0_i32_1 = arith.constant 0 : i32
    return %c0_i32, %c0_i32_0 : i32, i32
  }
  func.func @transform_6(%arg0: i32) -> (i32, i32) {
    %c0_i32 = arith.constant 0 : i32
    %c0_i32_0 = arith.constant 0 : i32
    %c0_i32_1 = arith.constant 0 : i32
    return %c0_i32, %c0_i32_0 : i32, i32
  }
  func.func @transform_7(%arg0: i32) -> (i32, i32) {
    %c0_i32 = arith.constant 0 : i32
    %c0_i32_0 = arith.constant 0 : i32
    %c0_i32_1 = arith.constant 0 : i32
    return %c0_i32, %c0_i32_0 : i32, i32
  }
  func.func @transform_8(%arg0: i32) -> (i32, i32) {
    %c0_i32 = arith.constant 0 : i32
    %c0_i32_0 = arith.constant 0 : i32
    %c0_i32_1 = arith.constant 0 : i32
    return %c0_i32, %c0_i32_0 : i32, i32
  }
  func.func @transform_9(%arg0: i32) -> (i32, i32) {
    %c0_i32 = arith.constant 0 : i32
    %c0_i32_0 = arith.constant 0 : i32
    return %arg0, %c0_i32 : i32, i32
  }
  func.func @transform_10(%arg0: i32) -> (i32, i32) {
    %c0_i32 = arith.constant 0 : i32
    %c0_i32_0 = arith.constant 0 : i32
    return %arg0, %c0_i32 : i32, i32
  }
  func.func @transform_11(%arg0: i32) -> (i32, i32) {
    %c0_i32 = arith.constant 0 : i32
    %c0_i32_0 = arith.constant 0 : i32
    return %arg0, %c0_i32 : i32, i32
  }
  func.func @transform_12(%arg0: i32) -> (i32, i32) {
    %c0_i32 = arith.constant 0 : i32
    %c0_i32_0 = arith.constant 0 : i32
    return %arg0, %c0_i32 : i32, i32
  }
}

</mosaic_0001>

<llo_original>
// kernel: tpu_custom_call.1
$region0: #{tpu_custom_call.1}
  #allocation0 [shape = 'u32[]', space=smem, size = 0x4, offset = 0x4, fixed_abs, tag = 'smem constant byte address 0x4 - core index']
  #allocation1 [shape = 'u32[144,128]{1,0:T(1,128)}', space=vmem, size = 0x12000, scoped, tag = 'internal scratch']
  #allocation2 [shape = 'f32[1,1]{1,0:T(1,128)S(1)}', space=vmem, size = 0x200, scoped, tag = 'scoped memory for tpu_custom_call.1']
  %s0 = inlined_call_operand.hbm [shape: f32[8,256], index: 0, kind: input, shape index: {}]
  %s1 = inlined_call_operand.hbm [shape: f32[256,128], index: 1, kind: input, shape index: {}]
  %s2 = inlined_call_operand.hbm [shape: f32[1,128], index: 2, kind: input, shape index: {}]
  %s3 = inlined_call_operand.hbm [shape: f32[128,16], index: 3, kind: input, shape index: {}]
  %s4 = inlined_call_operand.<no memory space> [shape: f32[1,1], index: 4, kind: input, shape index: {}]
  %s5 = inlined_call_operand.hbm [shape: f32[16,128], index: 5, kind: input, shape index: {}]
  %s6 = inlined_call_operand.hbm [shape: f32[1,128], index: 6, kind: input, shape index: {}]
  %s7 = inlined_call_operand.hbm [shape: f32[16,256], index: 7, kind: input, shape index: {}]
  %s8 = inlined_call_operand.hbm [shape: f32[1,256], index: 8, kind: input, shape index: {}]
  %s9 = inlined_call_operand.hbm [shape: f32[8,256], index: 9, kind: output, shape index: {0}]
  %s10 = inlined_call_operand.hbm [shape: f32[8,128], index: 10, kind: output, shape index: {1}]
  %s11 = inlined_call_operand.hbm [shape: f32[8,128], index: 11, kind: output, shape index: {2}]
  %s12 = inlined_call_operand.hbm [shape: f32[8,16], index: 12, kind: output, shape index: {3}]
  %13 = xla_tuple %s9, %s10, %s11, %s12
  %s14 = sld [smem:[#allocation0]]
  $region102: #{tpu_custom_call.1} parent=0
    _
  %s16 = ssub.s32 1, %s14
  %s17 = scalar_select 0, %s16, %s14
  %v18 = vstv %s4
  %19 = vst [vmem:[#allocation2] sm:$0x1] %v18
  $region1: #{tpu_custom_call.1} parent=0
    #allocation3 [shape = 'u8[8192]{0}', space=vmem, size = 0x2000, scoped, tag = 'input window, operand 0, single buffered']
    #allocation4 [shape = 's32[1]{0}', space=sflag, size = 0x4, scoped, tag = 'scoped memory for tpu_custom_call.1']
    #allocation5 [shape = 's32[1]{0}', space=sflag, size = 0x4, scoped, tag = 'scoped memory for tpu_custom_call.1']
    #allocation6 [shape = 'u8[131072]{0}', space=vmem, size = 0x20000, scoped, tag = 'input window, operand 1, single buffered']
    #allocation7 [shape = 's32[1]{0}', space=sflag, size = 0x4, scoped, tag = 'scoped memory for tpu_custom_call.1']
    #allocation8 [shape = 'u8[512]{0}', space=vmem, size = 0x400, scoped, tag = 'input window, operand 2, single buffered']
    #allocation9 [shape = 'u8[65536]{0}', space=vmem, size = 0x10000, scoped, tag = 'input window, operand 3, single buffered']
    #allocation10 [shape = 's32[1]{0}', space=sflag, size = 0x4, scoped, tag = 'scoped memory for tpu_custom_call.1']
    #allocation11 [shape = 'u8[8192]{0}', space=vmem, size = 0x2000, scoped, tag = 'input window, operand 5, single buffered']
    #allocation12 [shape = 'u8[512]{0}', space=vmem, size = 0x400, scoped, tag = 'input window, operand 6, single buffered']
    #allocation13 [shape = 's32[1]{0}', space=sflag, size = 0x4, scoped, tag = 'scoped memory for tpu_custom_call.1']
    #allocation14 [shape = 'u8[16384]{0}', space=vmem, size = 0x4000, scoped, tag = 'input window, operand 7, single buffered']
    #allocation15 [shape = 'u8[1024]{0}', space=vmem, size = 0x400, scoped, tag = 'input window, operand 8, single buffered']
    #allocation16 [shape = 's32[1]{0}', space=sflag, size = 0x4, scoped, tag = 'scoped memory for tpu_custom_call.1']
    #allocation17 [shape = 'u8[8192]{0}', space=vmem, size = 0x2000, scoped, tag = 'output window, operand 0, single buffered']
    #allocation18 [shape = 'u8[4096]{0}', space=vmem, size = 0x1000, scoped, tag = 'output window, operand 1, single buffered']
    #allocation19 [shape = 's32[1]{0}', space=sflag, size = 0x4, scoped, tag = 'scoped memory for tpu_custom_call.1']
    #allocation20 [shape = 'u8[4096]{0}', space=vmem, size = 0x1000, scoped, tag = 'output window, operand 2, single buffered']
    #allocation21 [shape = 'u8[4096]{0}', space=vmem, size = 0x1000, scoped, tag = 'output window, operand 3, single buffered']
    #allocation22 [shape = 's32[1]{0}', space=sflag, size = 0x4, scoped, tag = 'scoped memory for tpu_custom_call.1']
    %20 = vsyncpa [#allocation4], 0
    %21 = vsyncpa [#allocation7], 0
    %22 = vsyncpa [#allocation10], 0
    %23 = vsyncpa [#allocation13], 0
    %24 = vsyncpa [#allocation16], 0
    %25 = vsyncpa [#allocation5], 0
    %26 = vsyncpa [#allocation19], 0
    %27 = vsyncpa [#allocation22], 0
    // Predicated region
    $region2: #{tpu_custom_call.1} parent=1 // pred_check
      _
    $region3: #{tpu_custom_call.1} parent=1 // pred_check_branch
      %29 = sbr.rel (0) target = $region5
    $region4: #{tpu_custom_call.1} parent=1 // pred_region
      %s31 = ssub.s32 256, 256
      %32 = vsyncadd [#allocation4], %s31
      %s34 = sshll.u32 [#allocation3], 4
      %s35 = int_to_ptr.vmem [resolvable:$true] %s34
      %37 = dma.hbm_to_vmem [thread:$0]  %s0, 256, %s35, [#allocation4]
    $region5: #{tpu_custom_call.1} parent=1 // pred_fallthru
      _
    // Predicated region
    $region6: #{tpu_custom_call.1} parent=1 // pred_check
      _
    $region7: #{tpu_custom_call.1} parent=1 // pred_check_branch
      %39 = sbr.rel (0) target = $region9
    $region8: #{tpu_custom_call.1} parent=1 // pred_region
      %s41 = ssub.s32 4096, 4096
      %42 = vsyncadd [#allocation7], %s41
      %s43 = sshll.u32 [#allocation6], 4
      %s44 = int_to_ptr.vmem [resolvable:$true] %s43
      %49 = dma.hbm_to_vmem [thread:$0]  %s1, 4096, %s44, [#allocation7], 128, 128, 8
    $region9: #{tpu_custom_call.1} parent=1 // pred_fallthru
      _
    // Predicated region
    $region10: #{tpu_custom_call.1} parent=1 // pred_check
      _
    $region11: #{tpu_custom_call.1} parent=1 // pred_check_branch
      %51 = sbr.rel (0) target = $region13
    $region12: #{tpu_custom_call.1} parent=1 // pred_region
      %s53 = ssub.s32 16, 16
      %54 = vsyncadd [#allocation7], %s53
      %s56 = sshll.u32 [#allocation8], 4
      %s57 = int_to_ptr.vmem [resolvable:$true] %s56
      %59 = dma.hbm_to_vmem [thread:$0]  %s2, 16, %s57, [#allocation7]
    $region13: #{tpu_custom_call.1} parent=1 // pred_fallthru
      _
    // Predicated region
    $region14: #{tpu_custom_call.1} parent=1 // pred_check
      _
    $region15: #{tpu_custom_call.1} parent=1 // pred_check_branch
      %61 = sbr.rel (0) target = $region17
    $region16: #{tpu_custom_call.1} parent=1 // pred_region
      %s63 = ssub.s32 2048, 2048
      %64 = vsyncadd [#allocation10], %s63
      %s65 = sshll.u32 [#allocation9], 4
      %s66 = int_to_ptr.vmem [resolvable:$true] %s65
      %71 = dma.hbm_to_vmem [thread:$0]  %s3, 2048, %s66, [#allocation10], 128, 128, 8
    $region17: #{tpu_custom_call.1} parent=1 // pred_fallthru
      _
    // Predicated region
    $region18: #{tpu_custom_call.1} parent=1 // pred_check
      _
    $region19: #{tpu_custom_call.1} parent=1 // pred_check_branch
      %73 = sbr.rel (0) target = $region21
    $region20: #{tpu_custom_call.1} parent=1 // pred_region
      _
    $region21: #{tpu_custom_call.1} parent=1 // pred_fallthru
      _
    // Predicated region
    $region22: #{tpu_custom_call.1} parent=1 // pred_check
      _
    $region23: #{tpu_custom_call.1} parent=1 // pred_check_branch
      %75 = sbr.rel (0) target = $region25
    $region24: #{tpu_custom_call.1} parent=1 // pred_region
      %s77 = ssub.s32 256, 256
      %78 = vsyncadd [#allocation10], %s77
      %s79 = sshll.u32 [#allocation11], 4
      %s80 = int_to_ptr.vmem [resolvable:$true] %s79
      %85 = dma.hbm_to_vmem [thread:$0]  %s5, 256, %s80, [#allocation10], 128, 128, 8
    $region25: #{tpu_custom_call.1} parent=1 // pred_fallthru
      _
    // Predicated region
    $region26: #{tpu_custom_call.1} parent=1 // pred_check
      _
    $region27: #{tpu_custom_call.1} parent=1 // pred_check_branch
      %87 = sbr.rel (0) target = $region29
    $region28: #{tpu_custom_call.1} parent=1 // pred_region
      %s89 = ssub.s32 16, 16
      %90 = vsyncadd [#allocation13], %s89
      %s92 = sshll.u32 [#allocation12], 4
      %s93 = int_to_ptr.vmem [resolvable:$true] %s92
      %95 = dma.hbm_to_vmem [thread:$0]  %s6, 16, %s93, [#allocation13]
    $region29: #{tpu_custom_call.1} parent=1 // pred_fallthru
      _
    // Predicated region
    $region30: #{tpu_custom_call.1} parent=1 // pred_check
      _
    $region31: #{tpu_custom_call.1} parent=1 // pred_check_branch
      %97 = sbr.rel (0) target = $region33
    $region32: #{tpu_custom_call.1} parent=1 // pred_region
      %s99 = ssub.s32 512, 512
      %100 = vsyncadd [#allocation13], %s99
      %s101 = sshll.u32 [#allocation14], 4
      %s102 = int_to_ptr.vmem [resolvable:$true] %s101
      %107 = dma.hbm_to_vmem [thread:$0]  %s7, 512, %s102, [#allocation13], 256, 256, 16
    $region33: #{tpu_custom_call.1} parent=1 // pred_fallthru
      _
    // Predicated region
    $region34: #{tpu_custom_call.1} parent=1 // pred_check
      _
    $region35: #{tpu_custom_call.1} parent=1 // pred_check_branch
      %109 = sbr.rel (0) target = $region37
    $region36: #{tpu_custom_call.1} parent=1 // pred_region
      %s111 = ssub.s32 32, 32
      %112 = vsyncadd [#allocation16], %s111
      %s114 = sshll.u32 [#allocation15], 4
      %s115 = int_to_ptr.vmem [resolvable:$true] %s114
      %117 = dma.hbm_to_vmem [thread:$0]  %s8, 32, %s115, [#allocation16]
    $region37: #{tpu_custom_call.1} parent=1 // pred_fallthru
      _
    // Predicated region
    $region38: #{tpu_custom_call.1} parent=1 // pred_check
      _
    $region39: #{tpu_custom_call.1} parent=1 // pred_check_branch
      %119 = sbr.rel (0) target = $region41
    $region40: #{tpu_custom_call.1} parent=1 // pred_region
      %120 = dma.done [#allocation4], 256
    $region41: #{tpu_custom_call.1} parent=1 // pred_fallthru
      _
    // Predicated region
    $region42: #{tpu_custom_call.1} parent=1 // pred_check
      _
    $region43: #{tpu_custom_call.1} parent=1 // pred_check_branch
      %122 = sbr.rel (0) target = $region45
    $region44: #{tpu_custom_call.1} parent=1 // pred_region
      %123 = dma.done [#allocation7], 4096
    $region45: #{tpu_custom_call.1} parent=1 // pred_fallthru
      _
    // Predicated region
    $region46: #{tpu_custom_call.1} parent=1 // pred_check
      _
    $region47: #{tpu_custom_call.1} parent=1 // pred_check_branch
      %125 = sbr.rel (0) target = $region49
    $region48: #{tpu_custom_call.1} parent=1 // pred_region
      %126 = dma.done [#allocation7], 16
    $region49: #{tpu_custom_call.1} parent=1 // pred_fallthru
      _
    // Predicated region
    $region50: #{tpu_custom_call.1} parent=1 // pred_check
      _
    $region51: #{tpu_custom_call.1} parent=1 // pred_check_branch
      %128 = sbr.rel (0) target = $region53
    $region52: #{tpu_custom_call.1} parent=1 // pred_region
      %129 = dma.done [#allocation10], 2048
    $region53: #{tpu_custom_call.1} parent=1 // pred_fallthru
      _
    // Predicated region
    $region54: #{tpu_custom_call.1} parent=1 // pred_check
      _
    $region55: #{tpu_custom_call.1} parent=1 // pred_check_branch
      %131 = sbr.rel (0) target = $region57
    $region56: #{tpu_custom_call.1} parent=1 // pred_region
      %132 = dma.done [#allocation10], 256
    $region57: #{tpu_custom_call.1} parent=1 // pred_fallthru
      _
    // Predicated region
    $region58: #{tpu_custom_call.1} parent=1 // pred_check
      _
    $region59: #{tpu_custom_call.1} parent=1 // pred_check_branch
      %134 = sbr.rel (0) target = $region61
    $region60: #{tpu_custom_call.1} parent=1 // pred_region
      %135 = dma.done [#allocation13], 16
    $region61: #{tpu_custom_call.1} parent=1 // pred_fallthru
      _
    // Predicated region
    $region62: #{tpu_custom_call.1} parent=1 // pred_check
      _
    $region63: #{tpu_custom_call.1} parent=1 // pred_check_branch
      %137 = sbr.rel (0) target = $region65
    $region64: #{tpu_custom_call.1} parent=1 // pred_region
      %138 = dma.done [#allocation13], 512
    $region65: #{tpu_custom_call.1} parent=1 // pred_fallthru
      _
    // Predicated region
    $region66: #{tpu_custom_call.1} parent=1 // pred_check
      _
    $region67: #{tpu_custom_call.1} parent=1 // pred_check_branch
      %140 = sbr.rel (0) target = $region69
    $region68: #{tpu_custom_call.1} parent=1 // pred_region
      %141 = dma.done [#allocation16], 32
    $region69: #{tpu_custom_call.1} parent=1 // pred_fallthru
      _
    %v142 = vld [vmem:[#allocation3] sm:$0xff]
    %v143 = vld [vmem:[#allocation3 + $0x8] sm:$0xff]
    %v144 = vld [vmem:[#allocation6] sm:$0xff]
    %v145 = vld [vmem:[#allocation6 + $0x8] sm:$0xff]
    %v146 = vld [vmem:[#allocation6 + $0x10] sm:$0xff]
    %v147 = vld [vmem:[#allocation6 + $0x18] sm:$0xff]
    %v148 = vld [vmem:[#allocation6 + $0x20] sm:$0xff]
    %v149 = vld [vmem:[#allocation6 + $0x28] sm:$0xff]
    %v150 = vld [vmem:[#allocation6 + $0x30] sm:$0xff]
    %v151 = vld [vmem:[#allocation6 + $0x38] sm:$0xff]
    %v152 = vld [vmem:[#allocation6 + $0x40] sm:$0xff]
    %v153 = vld [vmem:[#allocation6 + $0x48] sm:$0xff]
    %v154 = vld [vmem:[#allocation6 + $0x50] sm:$0xff]
    %v155 = vld [vmem:[#allocation6 + $0x58] sm:$0xff]
    %v156 = vld [vmem:[#allocation6 + $0x60] sm:$0xff]
    %v157 = vld [vmem:[#allocation6 + $0x68] sm:$0xff]
    %v158 = vld [vmem:[#allocation6 + $0x70] sm:$0xff]
    %v159 = vld [vmem:[#allocation6 + $0x78] sm:$0xff]
    %v160 = vld [vmem:[#allocation6 + $0x80] sm:$0xff]
    %v161 = vld [vmem:[#allocation6 + $0x88] sm:$0xff]
    %v162 = vld [vmem:[#allocation6 + $0x90] sm:$0xff]
    %v163 = vld [vmem:[#allocation6 + $0x98] sm:$0xff]
    %v164 = vld [vmem:[#allocation6 + $0xa0] sm:$0xff]
    %v165 = vld [vmem:[#allocation6 + $0xa8] sm:$0xff]
    %v166 = vld [vmem:[#allocation6 + $0xb0] sm:$0xff]
    %v167 = vld [vmem:[#allocation6 + $0xb8] sm:$0xff]
    %v168 = vld [vmem:[#allocation6 + $0xc0] sm:$0xff]
    %v169 = vld [vmem:[#allocation6 + $0xc8] sm:$0xff]
    %v170 = vld [vmem:[#allocation6 + $0xd0] sm:$0xff]
    %v171 = vld [vmem:[#allocation6 + $0xd8] sm:$0xff]
    %v172 = vld [vmem:[#allocation6 + $0xe0] sm:$0xff]
    %v173 = vld [vmem:[#allocation6 + $0xe8] sm:$0xff]
    %v174 = vld [vmem:[#allocation6 + $0xf0] sm:$0xff]
    %v175 = vld [vmem:[#allocation6 + $0xf8] sm:$0xff]
    %v176 = vld [vmem:[#allocation8] sm:$0x1]
    %v178 = vlaneseq
    %v179 = vshrl.u32 %v178, 7
    %v180 = vsub.s32 0, %v179
    %v181 = vrot.slane %v176, %v180
    %183 = vmatprep.subr.mxu0 0.0
    %184 = vmatpush1.msra.mxu0 %v144
    %185 = vmatprep.subr.mxu0 0.0
    %186 = vmatpush1.msra.mxu0 %v145
    %187 = vmatprep.subr.mxu0 0.0
    %188 = vmatpush1.msra.mxu0 %v146
    %189 = vmatprep.subr.mxu0 0.0
    %190 = vmatpush1.msra.mxu0 %v147
    %191 = vmatprep.subr.mxu0 0.0
    %192 = vmatpush1.msra.mxu0 %v148
    %193 = vmatprep.subr.mxu0 0.0
    %194 = vmatpush1.msra.mxu0 %v149
    %195 = vmatprep.subr.mxu0 0.0
    %196 = vmatpush1.msra.mxu0 %v150
    %197 = vmatprep.subr.mxu0 0.0
    %198 = vmatpush1.msra.mxu0 %v151
    %199 = vmatprep.subr.mxu0 0.0
    %200 = vmatpush1.msra.mxu0 %v152
    %201 = vmatprep.subr.mxu0 0.0
    %202 = vmatpush1.msra.mxu0 %v153
    %203 = vmatprep.subr.mxu0 0.0
    %204 = vmatpush1.msra.mxu0 %v154
    %205 = vmatprep.subr.mxu0 0.0
    %206 = vmatpush1.msra.mxu0 %v155
    %207 = vmatprep.subr.mxu0 0.0
    %208 = vmatpush1.msra.mxu0 %v156
    %209 = vmatprep.subr.mxu0 0.0
    %210 = vmatpush1.msra.mxu0 %v157
    %211 = vmatprep.subr.mxu0 0.0
    %212 = vmatpush1.msra.mxu0 %v158
    %213 = vmatprep.subr.mxu0 0.0
    %214 = vmatpush1.msra.mxu0 %v159
    %215 = vmatprep.subr.mxu0 0.0
    %216 = vmatpush1.msra.mxu0 %v160
    %217 = vmatprep.subr.mxu0 0.0
    %218 = vmatpush1.msra.mxu0 %v161
    %219 = vmatprep.subr.mxu0 0.0
    %220 = vmatpush1.msra.mxu0 %v162
    %221 = vmatprep.subr.mxu0 0.0
    %222 = vmatpush1.msra.mxu0 %v163
    %223 = vmatprep.subr.mxu0 0.0
    %224 = vmatpush1.msra.mxu0 %v164
    %225 = vmatprep.subr.mxu0 0.0
    %226 = vmatpush1.msra.mxu0 %v165
    %227 = vmatprep.subr.mxu0 0.0
    %228 = vmatpush1.msra.mxu0 %v166
    %229 = vmatprep.subr.mxu0 0.0
    %230 = vmatpush1.msra.mxu0 %v167
    %231 = vmatprep.subr.mxu0 0.0
    %232 = vmatpush1.msra.mxu0 %v168
    %233 = vmatprep.subr.mxu0 0.0
    %234 = vmatpush1.msra.mxu0 %v169
    %235 = vmatprep.subr.mxu0 0.0
    %236 = vmatpush1.msra.mxu0 %v170
    %237 = vmatprep.subr.mxu0 0.0
    %238 = vmatpush1.msra.mxu0 %v171
    %239 = vmatprep.subr.mxu0 0.0
    %240 = vmatpush1.msra.mxu0 %v172
    %241 = vmatprep.subr.mxu0 0.0
    %242 = vmatpush1.msra.mxu0 %v173
    %243 = vmatprep.subr.mxu0 0.0
    %244 = vmatpush1.msra.mxu0 %v174
    %245 = vmatprep.subr.mxu0 0.0
    %246 = vmatpush1.msra.mxu0 %v175
    %247 = vmatprep.mubr.f32.mxu0 %v143
    %248 = vmatmul.mubr.f32.gmra.mrb[0].mxu0 %v142
    %v249 = vpop.f32.mrb[0].mxu0
    %v250 = vadd.f32 %v181, %v249
    %v251 = vpop.f32.mrb[0].mxu0
    %252 = vdwg.mxu0
    %253 = vst [vmem:[#allocation18] sm:$0xff] %v250
    %v254 = vld [vmem:[#allocation9] sm:$0xff]
    %v255 = vld [vmem:[#allocation9 + $0x8] sm:$0xff]
    %v256 = vld [vmem:[#allocation9 + $0x10] sm:$0xff]
    %v257 = vld [vmem:[#allocation9 + $0x18] sm:$0xff]
    %v258 = vld [vmem:[#allocation9 + $0x20] sm:$0xff]
    %v259 = vld [vmem:[#allocation9 + $0x28] sm:$0xff]
    %v260 = vld [vmem:[#allocation9 + $0x30] sm:$0xff]
    %v261 = vld [vmem:[#allocation9 + $0x38] sm:$0xff]
    %v262 = vld [vmem:[#allocation9 + $0x40] sm:$0xff]
    %v263 = vld [vmem:[#allocation9 + $0x48] sm:$0xff]
    %v264 = vld [vmem:[#allocation9 + $0x50] sm:$0xff]
    %v265 = vld [vmem:[#allocation9 + $0x58] sm:$0xff]
    %v266 = vld [vmem:[#allocation9 + $0x60] sm:$0xff]
    %v267 = vld [vmem:[#allocation9 + $0x68] sm:$0xff]
    %v268 = vld [vmem:[#allocation9 + $0x70] sm:$0xff]
    %v269 = vld [vmem:[#allocation9 + $0x78] sm:$0xff]
    %v270 = vld [vmem:[#allocation2] sm:$0x1]
    %v272 = vlaneseq
    %v273 = vshrl.u32 %v272, 7
    %v274 = vsub.s32 0, %v273
    %v275 = vrot.slane %v270, %v274
    %276 = vset.pattern.permute.xlu0 0
    %277 = vperm.xlu0 %276, %v275
    %v278 = vpop.permute.xlu0 %277
    %280 = vmatprep.subr.mxu0 0.0
    %281 = vmatpush1.msra.mxu0 %v254
    %282 = vmatprep.subr.mxu0 0.0
    %283 = vmatpush1.msra.mxu0 %v255
    %284 = vmatprep.subr.mxu0 0.0
    %285 = vmatpush1.msra.mxu0 %v256
    %286 = vmatprep.subr.mxu0 0.0
    %287 = vmatpush1.msra.mxu0 %v257
    %288 = vmatprep.subr.mxu0 0.0
    %289 = vmatpush1.msra.mxu0 %v258
    %290 = vmatprep.subr.mxu0 0.0
    %291 = vmatpush1.msra.mxu0 %v259
    %292 = vmatprep.subr.mxu0 0.0
    %293 = vmatpush1.msra.mxu0 %v260
    %294 = vmatprep.subr.mxu0 0.0
    %295 = vmatpush1.msra.mxu0 %v261
    %296 = vmatprep.subr.mxu0 0.0
    %297 = vmatpush1.msra.mxu0 %v262
    %298 = vmatprep.subr.mxu0 0.0
    %299 = vmatpush1.msra.mxu0 %v263
    %300 = vmatprep.subr.mxu0 0.0
    %301 = vmatpush1.msra.mxu0 %v264
    %302 = vmatprep.subr.mxu0 0.0
    %303 = vmatpush1.msra.mxu0 %v265
    %304 = vmatprep.subr.mxu0 0.0
    %305 = vmatpush1.msra.mxu0 %v266
    %306 = vmatprep.subr.mxu0 0.0
    %307 = vmatpush1.msra.mxu0 %v267
    %308 = vmatprep.subr.mxu0 0.0
    %309 = vmatpush1.msra.mxu0 %v268
    %310 = vmatprep.subr.mxu0 0.0
    %311 = vmatpush1.msra.mxu0 %v269
    %312 = vmatprep.subr.mxu0 0.0
    %313 = vmatpush1.msra.mxu0 0.0
    %314 = vmatprep.subr.mxu0 0.0
    %315 = vmatpush1.msra.mxu0 0.0
    %316 = vmatprep.subr.mxu0 0.0
    %317 = vmatpush1.msra.mxu0 0.0
    %318 = vmatprep.subr.mxu0 0.0
    %319 = vmatpush1.msra.mxu0 0.0
    %320 = vmatprep.subr.mxu0 0.0
    %321 = vmatpush1.msra.mxu0 0.0
    %322 = vmatprep.subr.mxu0 0.0
    %323 = vmatpush1.msra.mxu0 0.0
    %324 = vmatprep.subr.mxu0 0.0
    %325 = vmatpush1.msra.mxu0 0.0
    %326 = vmatprep.subr.mxu0 0.0
    %327 = vmatpush1.msra.mxu0 0.0
    %328 = vmatprep.subr.mxu0 0.0
    %329 = vmatpush1.msra.mxu0 0.0
    %330 = vmatprep.subr.mxu0 0.0
    %331 = vmatpush1.msra.mxu0 0.0
    %332 = vmatprep.subr.mxu0 0.0
    %333 = vmatpush1.msra.mxu0 0.0
    %334 = vmatprep.subr.mxu0 0.0
    %335 = vmatpush1.msra.mxu0 0.0
    %336 = vmatprep.subr.mxu0 0.0
    %337 = vmatpush1.msra.mxu0 0.0
    %338 = vmatprep.subr.mxu0 0.0
    %339 = vmatpush1.msra.mxu0 0.0
    %340 = vmatprep.subr.mxu0 0.0
    %341 = vmatpush1.msra.mxu0 0.0
    %342 = vmatprep.subr.mxu0 0.0
    %343 = vmatpush1.msra.mxu0 0.0
    %344 = vmatprep.mubr.f32.mxu0 0.0
    %345 = vmatmul.mubr.f32.gmra.mrb[0].mxu0 %v250
    %v346 = vpop.f32.mrb[0].mxu0
    %v347 = vadd.f32 %v278, %v346
    %v348 = vpop.f32.mrb[0].mxu0
    %349 = vdwg.mxu0
    %vm350 = vcmask 130048
    %351 = vst.msk [vmem:[#allocation21] sm:$0xff] %vm350, %v347
    %v352 = vld [vmem:[#allocation11] sm:$0xff]
    %v353 = vld [vmem:[#allocation11 + $0x8] sm:$0xff]
    %v354 = vld [vmem:[#allocation12] sm:$0x1]
    %v356 = vlaneseq
    %v357 = vshrl.u32 %v356, 7
    %v358 = vsub.s32 0, %v357
    %v359 = vrot.slane %v354, %v358
    %v362 = vsel %vm350, %v347, 0
    %364 = vmatprep.subr.mxu0 0.0
    %365 = vmatpush1.msra.mxu0 %v352
    %366 = vmatprep.subr.mxu0 0.0
    %367 = vmatpush1.msra.mxu0 %v353
    %368 = vmatprep.subr.mxu0 0.0
    %369 = vmatpush1.msra.mxu0 0.0
    %370 = vmatprep.subr.mxu0 0.0
    %371 = vmatpush1.msra.mxu0 0.0
    %372 = vmatprep.subr.mxu0 0.0
    %373 = vmatpush1.msra.mxu0 0.0
    %374 = vmatprep.subr.mxu0 0.0
    %375 = vmatpush1.msra.mxu0 0.0
    %376 = vmatprep.subr.mxu0 0.0
    %377 = vmatpush1.msra.mxu0 0.0
    %378 = vmatprep.subr.mxu0 0.0
    %379 = vmatpush1.msra.mxu0 0.0
    %380 = vmatprep.subr.mxu0 0.0
    %381 = vmatpush1.msra.mxu0 0.0
    %382 = vmatprep.subr.mxu0 0.0
    %383 = vmatpush1.msra.mxu0 0.0
    %384 = vmatprep.subr.mxu0 0.0
    %385 = vmatpush1.msra.mxu0 0.0
    %386 = vmatprep.subr.mxu0 0.0
    %387 = vmatpush1.msra.mxu0 0.0
    %388 = vmatprep.subr.mxu0 0.0
    %389 = vmatpush1.msra.mxu0 0.0
    %390 = vmatprep.subr.mxu0 0.0
    %391 = vmatpush1.msra.mxu0 0.0
    %392 = vmatprep.subr.mxu0 0.0
    %393 = vmatpush1.msra.mxu0 0.0
    %394 = vmatprep.subr.mxu0 0.0
    %395 = vmatpush1.msra.mxu0 0.0
    %396 = vmatprep.subr.mxu0 0.0
    %397 = vmatpush1.msra.mxu0 0.0
    %398 = vmatprep.subr.mxu0 0.0
    %399 = vmatpush1.msra.mxu0 0.0
    %400 = vmatprep.subr.mxu0 0.0
    %401 = vmatpush1.msra.mxu0 0.0
    %402 = vmatprep.subr.mxu0 0.0
    %403 = vmatpush1.msra.mxu0 0.0
    %404 = vmatprep.subr.mxu0 0.0
    %405 = vmatpush1.msra.mxu0 0.0
    %406 = vmatprep.subr.mxu0 0.0
    %407 = vmatpush1.msra.mxu0 0.0
    %408 = vmatprep.subr.mxu0 0.0
    %409 = vmatpush1.msra.mxu0 0.0
    %410 = vmatprep.subr.mxu0 0.0
    %411 = vmatpush1.msra.mxu0 0.0
    %412 = vmatprep.subr.mxu0 0.0
    %413 = vmatpush1.msra.mxu0 0.0
    %414 = vmatprep.subr.mxu0 0.0
    %415 = vmatpush1.msra.mxu0 0.0
    %416 = vmatprep.subr.mxu0 0.0
    %417 = vmatpush1.msra.mxu0 0.0
    %418 = vmatprep.subr.mxu0 0.0
    %419 = vmatpush1.msra.mxu0 0.0
    %420 = vmatprep.subr.mxu0 0.0
    %421 = vmatpush1.msra.mxu0 0.0
    %422 = vmatprep.subr.mxu0 0.0
    %423 = vmatpush1.msra.mxu0 0.0
    %424 = vmatprep.subr.mxu0 0.0
    %425 = vmatpush1.msra.mxu0 0.0
    %426 = vmatprep.subr.mxu0 0.0
    %427 = vmatpush1.msra.mxu0 0.0
    %428 = vmatprep.mubr.f32.mxu0 0.0
    %429 = vmatmul.mubr.f32.gmra.mrb[0].mxu0 %v362
    %v430 = vpop.f32.mrb[0].mxu0
    %v431 = vadd.f32 %v359, %v430
    %v432 = vpop.f32.mrb[0].mxu0
    %433 = vdwg.mxu0
    %434 = vst [vmem:[#allocation20] sm:$0xff] %v431
    %v435 = vld [vmem:[#allocation14] sm:$0xff]
    %v436 = vld [vmem:[#allocation14 + $0x8] sm:$0xff]
    %v437 = vld [vmem:[#allocation14 + $0x10] sm:$0xff]
    %v438 = vld [vmem:[#allocation14 + $0x18] sm:$0xff]
    %v439 = vld [vmem:[#allocation15] sm:$0x3]
    %v441 = vlaneseq
    %v442 = vshrl.u32 %v441, 7
    %v443 = vsub.s32 0, %v442
    %v444 = vrot.slane %v439, %v443
    %v445 = vlaneseq
    %v446 = vshrl.u32 %v445, 7
    %v447 = vsub.s32 1, %v446
    %v448 = vrot.slane %v439, %v447
    %451 = vmatprep.subr.mxu0 %v436
    %452 = vmatpush1.msra.mxu0 %v435
    %453 = vmatprep.subr.mxu0 %v438
    %454 = vmatpush1.msra.mxu0 %v437
    %455 = vmatprep.subr.mxu0 0.0
    %456 = vmatpush1.msra.mxu0 0.0
    %457 = vmatprep.subr.mxu0 0.0
    %458 = vmatpush1.msra.mxu0 0.0
    %459 = vmatprep.subr.mxu0 0.0
    %460 = vmatpush1.msra.mxu0 0.0
    %461 = vmatprep.subr.mxu0 0.0
    %462 = vmatpush1.msra.mxu0 0.0
    %463 = vmatprep.subr.mxu0 0.0
    %464 = vmatpush1.msra.mxu0 0.0
    %465 = vmatprep.subr.mxu0 0.0
    %466 = vmatpush1.msra.mxu0 0.0
    %467 = vmatprep.subr.mxu0 0.0
    %468 = vmatpush1.msra.mxu0 0.0
    %469 = vmatprep.subr.mxu0 0.0
    %470 = vmatpush1.msra.mxu0 0.0
    %471 = vmatprep.subr.mxu0 0.0
    %472 = vmatpush1.msra.mxu0 0.0
    %473 = vmatprep.subr.mxu0 0.0
    %474 = vmatpush1.msra.mxu0 0.0
    %475 = vmatprep.subr.mxu0 0.0
    %476 = vmatpush1.msra.mxu0 0.0
    %477 = vmatprep.subr.mxu0 0.0
    %478 = vmatpush1.msra.mxu0 0.0
    %479 = vmatprep.subr.mxu0 0.0
    %480 = vmatpush1.msra.mxu0 0.0
    %481 = vmatprep.subr.mxu0 0.0
    %482 = vmatpush1.msra.mxu0 0.0
    %483 = vmatprep.subr.mxu0 0.0
    %484 = vmatpush1.msra.mxu0 0.0
    %485 = vmatprep.subr.mxu0 0.0
    %486 = vmatpush1.msra.mxu0 0.0
    %487 = vmatprep.subr.mxu0 0.0
    %488 = vmatpush1.msra.mxu0 0.0
    %489 = vmatprep.subr.mxu0 0.0
    %490 = vmatpush1.msra.mxu0 0.0
    %491 = vmatprep.subr.mxu0 0.0
    %492 = vmatpush1.msra.mxu0 0.0
    %493 = vmatprep.subr.mxu0 0.0
    %494 = vmatpush1.msra.mxu0 0.0
    %495 = vmatprep.subr.mxu0 0.0
    %496 = vmatpush1.msra.mxu0 0.0
    %497 = vmatprep.subr.mxu0 0.0
    %498 = vmatpush1.msra.mxu0 0.0
    %499 = vmatprep.subr.mxu0 0.0
    %500 = vmatpush1.msra.mxu0 0.0
    %501 = vmatprep.subr.mxu0 0.0
    %502 = vmatpush1.msra.mxu0 0.0
    %503 = vmatprep.subr.mxu0 0.0
    %504 = vmatpush1.msra.mxu0 0.0
    %505 = vmatprep.subr.mxu0 0.0
    %506 = vmatpush1.msra.mxu0 0.0
    %507 = vmatprep.subr.mxu0 0.0
    %508 = vmatpush1.msra.mxu0 0.0
    %509 = vmatprep.subr.mxu0 0.0
    %510 = vmatpush1.msra.mxu0 0.0
    %511 = vmatprep.subr.mxu0 0.0
    %512 = vmatpush1.msra.mxu0 0.0
    %513 = vmatprep.subr.mxu0 0.0
    %514 = vmatpush1.msra.mxu0 0.0
    %515 = vmatprep.mubr.f32.mxu0 0.0
    %516 = vmatmul.mubr.f32.gmra.mrb[0].mxu0 %v362
    %v517 = vpop.f32.mrb[0].mxu0
    %v518 = vadd.f32 %v444, %v517
    %v519 = vpop.f32.mrb[0].mxu0
    %v520 = vadd.f32 %v448, %v519
    %521 = vdwg.mxu0
    %522 = vst [vmem:[#allocation17] sm:$0xff] %v518
    %523 = vst [vmem:[#allocation17 + $0x8] sm:$0xff] %v520
    // Predicated region
    $region70: #{tpu_custom_call.1} parent=1 // pred_check
      _
    $region71: #{tpu_custom_call.1} parent=1 // pred_check_branch
      %525 = sbr.rel (0) target = $region73
    $region72: #{tpu_custom_call.1} parent=1 // pred_region
      %s527 = ssub.s32 256, 256
      %528 = vsyncadd [#allocation5], %s527
      %s530 = sshll.u32 [#allocation17], 4
      %s531 = int_to_ptr.vmem [resolvable:$true] %s530
      %533 = dma.vmem_to_hbm [thread:$0]  %s531, 256, %s9, [#allocation5]
    $region73: #{tpu_custom_call.1} parent=1 // pred_fallthru
      _
    // Predicated region
    $region74: #{tpu_custom_call.1} parent=1 // pred_check
      _
    $region75: #{tpu_custom_call.1} parent=1 // pred_check_branch
      %535 = sbr.rel (0) target = $region77
    $region76: #{tpu_custom_call.1} parent=1 // pred_region
      %s537 = ssub.s32 128, 128
      %538 = vsyncadd [#allocation19], %s537
      %s540 = sshll.u32 [#allocation18], 4
      %s541 = int_to_ptr.vmem [resolvable:$true] %s540
      %543 = dma.vmem_to_hbm [thread:$0]  %s541, 128, %s10, [#allocation19]
    $region77: #{tpu_custom_call.1} parent=1 // pred_fallthru
      _
    // Predicated region
    $region78: #{tpu_custom_call.1} parent=1 // pred_check
      _
    $region79: #{tpu_custom_call.1} parent=1 // pred_check_branch
      %545 = sbr.rel (0) target = $region81
    $region80: #{tpu_custom_call.1} parent=1 // pred_region
      %s547 = ssub.s32 128, 128
      %548 = vsyncadd [#allocation19], %s547
      %s550 = sshll.u32 [#allocation20], 4
      %s551 = int_to_ptr.vmem [resolvable:$true] %s550
      %553 = dma.vmem_to_hbm [thread:$0]  %s551, 128, %s11, [#allocation19]
    $region81: #{tpu_custom_call.1} parent=1 // pred_fallthru
      _
    // Predicated region
    $region82: #{tpu_custom_call.1} parent=1 // pred_check
      _
    $region83: #{tpu_custom_call.1} parent=1 // pred_check_branch
      %555 = sbr.rel (0) target = $region85
    $region84: #{tpu_custom_call.1} parent=1 // pred_region
      %s557 = ssub.s32 128, 128
      %558 = vsyncadd [#allocation22], %s557
      %s560 = sshll.u32 [#allocation21], 4
      %s561 = int_to_ptr.vmem [resolvable:$true] %s560
      %563 = dma.vmem_to_hbm [thread:$0]  %s561, 128, %s12, [#allocation22]
    $region85: #{tpu_custom_call.1} parent=1 // pred_fallthru
      _
    // Predicated region
    $region86: #{tpu_custom_call.1} parent=1 // pred_check
      _
    $region87: #{tpu_custom_call.1} parent=1 // pred_check_branch
      %565 = sbr.rel (0) target = $region89
    $region88: #{tpu_custom_call.1} parent=1 // pred_region
      %566 = dma.done [#allocation5], 256
    $region89: #{tpu_custom_call.1} parent=1 // pred_fallthru
      _
    // Predicated region
    $region90: #{tpu_custom_call.1} parent=1 // pred_check
      _
    $region91: #{tpu_custom_call.1} parent=1 // pred_check_branch
      %568 = sbr.rel (0) target = $region93
    $region92: #{tpu_custom_call.1} parent=1 // pred_region
      %569 = dma.done [#allocation19], 128
    $region93: #{tpu_custom_call.1} parent=1 // pred_fallthru
      _
    // Predicated region
    $region94: #{tpu_custom_call.1} parent=1 // pred_check
      _
    $region95: #{tpu_custom_call.1} parent=1 // pred_check_branch
      %571 = sbr.rel (0) target = $region97
    $region96: #{tpu_custom_call.1} parent=1 // pred_region
      %572 = dma.done [#allocation19], 128
    $region97: #{tpu_custom_call.1} parent=1 // pred_fallthru
      _
    // Predicated region
    $region98: #{tpu_custom_call.1} parent=1 // pred_check
      _
    $region99: #{tpu_custom_call.1} parent=1 // pred_check_branch
      %574 = sbr.rel (0) target = $region101
    $region100: #{tpu_custom_call.1} parent=1 // pred_region
      %575 = dma.done [#allocation22], 128
    $region101: #{tpu_custom_call.1} parent=1 // pred_fallthru
      _
    %576 = vsyncpa [#allocation4], 1
    %577 = vsyncpa [#allocation7], 1
    %578 = vsyncpa [#allocation10], 1
    %579 = vsyncpa [#allocation13], 1
    %580 = vsyncpa [#allocation16], 1
    %581 = vsyncpa [#allocation5], 1
    %582 = vsyncpa [#allocation19], 1
    %583 = vsyncpa [#allocation22], 1

</llo_original>
